<compile_context>
chip_gen: v7x
topology: tpu7x:2x2x1
jax: 0.10.0
libtpu: 0.0.40
codegen_flags: <defaults>
</compile_context>

<pallas_src>
import functools

import jax
import jax.numpy as jnp
from jax.experimental import pallas as pl
from jax.experimental.pallas import tpu as pltpu

_LANE = 128
_SUBLANE = 8


def _cdiv(a, b):
    return -(-a // b)


def _round_up(x, m):
    return _cdiv(x, m) * m


def _vmem_budget_and_limit():
    """Generation-aware (tile-sizing budget, scoped VMEM limit) in bytes."""
    try:
        cap = int(pltpu.get_tpu_info().vmem_capacity_bytes)
    except Exception:
        cap = 64 * 1024 * 1024  # conservative fallback (v7x-sized)
    if cap >= 96 * 1024 * 1024:                      # v5e / v6e: 128 MiB
        return 64 * 1024 * 1024, 96 * 1024 * 1024
    return 40 * 1024 * 1024, 48 * 1024 * 1024        # v7x: 64 MiB per TC


# ---------------------------------------------------------------------------
# Kernels
# ---------------------------------------------------------------------------
def _linear_kernel(x_ref, w_ref, b_ref, o_ref):
    # y = x @ W + b   (W already transposed: [F_in, F_out]; f32 accumulation)
    acc = jnp.dot(x_ref[...], w_ref[...], preferred_element_type=jnp.float32)
    o_ref[...] = (acc + b_ref[...]).astype(o_ref.dtype)


def _linear_kernel_ktiled(x_ref, w_ref, b_ref, o_ref, acc_ref):
    k = pl.program_id(1)

    @pl.when(k == 0)
    def _():
        acc_ref[...] = jnp.zeros_like(acc_ref)

    acc_ref[...] += jnp.dot(x_ref[...], w_ref[...],
                            preferred_element_type=jnp.float32)

    @pl.when(k == pl.num_programs(1) - 1)
    def _():
        o_ref[...] = (acc_ref[...] + b_ref[...]).astype(o_ref.dtype)


# ---------------------------------------------------------------------------
# Tiling helpers
# ---------------------------------------------------------------------------
def _choose_tm_resident(n, f_in, f_out, x_isz, w_isz, budget):
    """Row tile: >= 2 grid steps (v7x megacore), capped at 4096 rows."""
    tm = min(4096, max(_SUBLANE, _round_up(_cdiv(max(n, 1), 2), _SUBLANE)))

    def vmem_bytes(t):
        # Double-buffered x / out tiles; grid-invariant weight + bias counted
        # conservatively at 2x (they are only DMA'd once regardless).
        return (2 * t * f_in * x_isz + 2 * t * f_out * 4
                + 2 * (f_in * f_out * w_isz + f_out * 4))

    while tm > _SUBLANE and vmem_bytes(tm) > budget:
        tm = max(_SUBLANE, _round_up(tm // 2, _SUBLANE))
    return tm


def _choose_ktiled_tiles(n, f_out, x_isz, w_isz, budget):
    tm = min(1024, max(_SUBLANE, _round_up(_cdiv(max(n, 1), 2), _SUBLANE)))
    tk = 512  # multiple of 128

    def vmem_bytes(t_m, t_k):
        return (2 * t_m * t_k * x_isz + 2 * t_k * f_out * w_isz
                + 2 * t_m * f_out * 4          # out tiles
                + t_m * f_out * 4              # f32 accumulator scratch
                + 2 * f_out * 4)               # bias

    while tk > _LANE and vmem_bytes(tm, tk) > budget:
        tk //= 2
    while tm > _SUBLANE and vmem_bytes(tm, tk) > budget:
        tm = max(_SUBLANE, _round_up(tm // 2, _SUBLANE))
    return tm, tk


# ---------------------------------------------------------------------------
# pallas_call wrappers
# ---------------------------------------------------------------------------
@functools.partial(jax.jit, static_argnames=("tm", "vmem_limit"))
def _pallas_linear_resident(x, w, b, *, tm, vmem_limit):
    n, f_in = x.shape
    f_out = w.shape[1]
    out_dtype = b.dtype
    o_isz = jnp.dtype(out_dtype).itemsize
    cost = pl.CostEstimate(
        flops=2 * n * f_in * f_out,
        transcendentals=0,
        bytes_accessed=(n * f_in * jnp.dtype(x.dtype).itemsize
                        + f_in * f_out * jnp.dtype(w.dtype).itemsize
                        + f_out * o_isz + n * f_out * o_isz),
    )
    return pl.pallas_call(
        _linear_kernel,
        out_shape=jax.ShapeDtypeStruct((n, f_out), out_dtype),
        grid=(_cdiv(n, tm),),
        in_specs=[
            pl.BlockSpec((tm, f_in), lambda i: (i, 0)),      # row tile of x
            pl.BlockSpec((f_in, f_out), lambda i: (0, 0)),   # resident weight
            pl.BlockSpec((1, f_out), lambda i: (0, 0)),      # resident bias
        ],
        out_specs=pl.BlockSpec((tm, f_out), lambda i: (i, 0)),
        compiler_params=pltpu.CompilerParams(
            dimension_semantics=("parallel",),
            vmem_limit_bytes=vmem_limit,
        ),
        cost_estimate=cost,
    )(x, w, b)


@functools.partial(jax.jit, static_argnames=("tm", "tk", "vmem_limit"))
def _pallas_linear_ktiled(x, w, b, *, tm, tk, vmem_limit):
    n, f_in = x.shape            # f_in already padded to a multiple of tk
    f_out = w.shape[1]
    out_dtype = b.dtype
    o_isz = jnp.dtype(out_dtype).itemsize
    cost = pl.CostEstimate(
        flops=2 * n * f_in * f_out,
        transcendentals=0,
        bytes_accessed=(n * f_in * jnp.dtype(x.dtype).itemsize
                        + f_in * f_out * jnp.dtype(w.dtype).itemsize
                        + (n + 1) * f_out * o_isz),
    )
    return pl.pallas_call(
        _linear_kernel_ktiled,
        out_shape=jax.ShapeDtypeStruct((n, f_out), out_dtype),
        grid=(_cdiv(n, tm), f_in // tk),
        in_specs=[
            pl.BlockSpec((tm, tk), lambda i, k: (i, k)),
            pl.BlockSpec((tk, f_out), lambda i, k: (k, 0)),
            pl.BlockSpec((1, f_out), lambda i, k: (0, 0)),
        ],
        out_specs=pl.BlockSpec((tm, f_out), lambda i, k: (i, 0)),
        scratch_shapes=[pltpu.VMEM((tm, f_out), jnp.float32)],
        compiler_params=pltpu.CompilerParams(
            dimension_semantics=("parallel", "arbitrary"),
            vmem_limit_bytes=vmem_limit,
        ),
        cost_estimate=cost,
    )(x, w, b)


def pallas_linear(x, w, b):
    """y = x @ w + b with w: [F_in, F_out] (pre-transposed), b: [1, F_out]."""
    n, f_in = x.shape
    f_out = w.shape[1]
    x_isz = jnp.dtype(x.dtype).itemsize
    w_isz = jnp.dtype(w.dtype).itemsize
    budget, limit = _vmem_budget_and_limit()

    resident_w_bytes = 2 * (f_in * f_out * w_isz + f_out * 4)
    if resident_w_bytes <= budget // 2:
        tm = _choose_tm_resident(n, f_in, f_out, x_isz, w_isz, budget)
        return _pallas_linear_resident(x, w, b, tm=tm, vmem_limit=limit)

    # K-tiled fallback for weights too large to keep VMEM-resident
    # (earliest relevant on v7x's 64 MiB parts).
    tm, tk = _choose_ktiled_tiles(n, f_out, x_isz, w_isz, budget)
    f_in_pad = _round_up(f_in, tk)
    if f_in_pad != f_in:
        x = jnp.pad(x, ((0, 0), (0, f_in_pad - f_in)))
        w = jnp.pad(w, ((0, f_in_pad - f_in), (0, 0)))
    return _pallas_linear_ktiled(x, w, b, tm=tm, tk=tk, vmem_limit=limit)


# ---------------------------------------------------------------------------
# Module wrapper
# ---------------------------------------------------------------------------
class PygLinearPassPallas:
    """JAX/Pallas equivalent of PygLinearPass wrapping nn.Linear.

    w_t: [F_in, F_out]  (transposed nn.Linear weight), b: [1, F_out].
    compute_dtype: optional (e.g. jnp.bfloat16) opt-in low-precision input /
    weight dtype with f32 accumulation and f32 output.  Note: with
    feats_appended_to_coords=True the fused coordinate pass-through is only
    bit-exact in the default f32 mode.
    """

    def __init__(self, w_t, b, feats_appended_to_coords=False,
                 return_coords_and_edges=False, compute_dtype=None):
        self.feats_appended_to_coords = feats_appended_to_coords
        self.return_coords_and_edges = return_coords_and_edges
        self.compute_dtype = compute_dtype
        self.intermediate_coords = None

        f_in, f_out = w_t.shape
        if feats_appended_to_coords:
            # Fuse the coordinate passthrough into the matmul:
            #   [h[:, :3], h[:, 3:] @ W^T + b]  ==  h @ W_aug + b_aug
            # with W_aug = [[I3, 0], [0, W^T]], b_aug = [0, 0, 0, b].
            w_aug = jnp.zeros((3 + f_in, 3 + f_out), dtype=w_t.dtype)
            w_aug = w_aug.at[:3, :3].set(jnp.eye(3, dtype=w_t.dtype))
            w_aug = w_aug.at[3:, 3:].set(w_t)
            b_aug = jnp.concatenate(
                [jnp.zeros((1, 3), dtype=b.dtype), b], axis=1)
            self._w, self._b = w_aug, b_aug
        else:
            self._w, self._b = w_t, b

        self._b = self._b.astype(jnp.float32)          # output stays f32
        if compute_dtype is not None:
            self._w = self._w.astype(compute_dtype)

    def __call__(self, h, **kwargs):
        if self.feats_appended_to_coords:
            # TODO(synk): original module calls to_numpy() here; we keep the
            # coords on device to avoid a forced device->host sync.
            self.intermediate_coords = h[:, :3]
        else:
            self.intermediate_coords = kwargs.get('coord')

        x = h if self.compute_dtype is None else h.astype(self.compute_dtype)
        res = pallas_linear(x, self._w, self._b)

        if self.return_coords_and_edges:
            return (res, kwargs['coord'], kwargs['edge_attr'],
                    kwargs.get('edge_messages', None))
        return res


# ---------------------------------------------------------------------------
# Self-test
# ---------------------------------------------------------------------------
if __name__ == "__main__":
    key = jax.random.PRNGKey(0)
    k_h, k_w, k_b, k_c, k_e, k_x3, k_w3, k_b3 = jax.random.split(key, 8)

    HIGH = jax.lax.Precision.HIGHEST

    n_nodes = 16
    f_in = 32
    f_out = 32
    n_edges = 24
    edge_dim = 4

    # Deterministic "parameters" for the wrapped nn.Linear(f_in, f_out).
    w = jax.random.normal(k_w, (f_out, f_in), dtype=jnp.float32) * 0.1
    b = jax.random.normal(k_b, (f_out,), dtype=jnp.float32) * 0.01
    w_t = jnp.transpose(w)            # [F_in, F_out]
    b_row = b.reshape(1, f_out)       # [1, F_out]

    # Node features with coords appended in the first 3 columns: [N, 3 + F_in]
    h = jax.random.normal(k_h, (n_nodes, 3 + f_in), dtype=jnp.float32)
    coord = jax.random.normal(k_c, (n_nodes, 3), dtype=jnp.float32)
    edge_attr = jax.random.normal(k_e, (n_edges, edge_dim), dtype=jnp.float32)

    # Case 1: feats_appended_to_coords=True (fused pass-through), plain result.
    layer1 = PygLinearPassPallas(w_t, b_row, feats_appended_to_coords=True)
    res1 = jax.block_until_ready(layer1(h))
    ref1 = jnp.concatenate(
        [h[:, :3], jnp.dot(h[:, 3:], w_t, precision=HIGH) + b_row], axis=1)
    assert res1.shape == (n_nodes, 3 + f_out)
    assert jnp.allclose(res1, ref1, atol=2e-3, rtol=2e-3), "case 1 mismatch"

    # Case 2: feats_appended_to_coords=False, return_coords_and_edges=True.
    h2 = h[:, 3:]
    layer2 = PygLinearPassPallas(w_t, b_row, feats_appended_to_coords=False,
                                 return_coords_and_edges=True)
    res2, c2, e2, m2 = layer2(h2, coord=coord, edge_attr=edge_attr)
    res2 = jax.block_until_ready(res2)
    ref2 = jnp.dot(h2, w_t, precision=HIGH) + b_row
    assert res2.shape == (n_nodes, f_out)
    assert jnp.allclose(res2, ref2, atol=2e-3, rtol=2e-3), "case 2 mismatch"
    assert c2.shape == coord.shape and e2.shape == edge_attr.shape
    assert m2 is None

    # Case 3: opt-in bf16 compute path (f32 accumulation / output).
    layer3 = PygLinearPassPallas(w_t, b_row, compute_dtype=jnp.bfloat16)
    res3 = jax.block_until_ready(layer3(h2, coord=coord))
    assert res3.dtype == jnp.float32
    assert jnp.allclose(res3, ref2, atol=5e-2, rtol=5e-2), "bf16 path mismatch"

    # Case 4: exercise the K-tiled fallback path directly at small shapes.
    n3, f_in3, f_out3 = 64, 200, 64
    x3 = jax.random.normal(k_x3, (n3, f_in3), dtype=jnp.float32)
    w3 = jax.random.normal(k_w3, (f_in3, f_out3), dtype=jnp.float32) * 0.05
    b3 = jax.random.normal(k_b3, (1, f_out3), dtype=jnp.float32) * 0.01
    _, limit = _vmem_budget_and_limit()
    tk3 = 128
    pad3 = _round_up(f_in3, tk3) - f_in3
    x3p = jnp.pad(x3, ((0, 0), (0, pad3)))
    w3p = jnp.pad(w3, ((0, pad3), (0, 0)))
    out3 = jax.block_until_ready(
        _pallas_linear_ktiled(x3p, w3p, b3, tm=32, tk=tk3, vmem_limit=limit))
    ref3 = jnp.dot(x3, w3, precision=HIGH) + b3
    assert jnp.allclose(out3, ref3, atol=2e-3, rtol=2e-3), "k-tiled mismatch"

    print("KERNEL_OK")
</pallas_src>

<mosaic_0001>
module attributes {stable_mosaic.version = 11 : i64} {
  func.func @_linear_kernel(%arg0: i32, %arg1: memref<8x35xf32, #tpu.memory_space<vmem>>, %arg2: memref<35x35xf32, #tpu.memory_space<vmem>>, %arg3: memref<1x35xf32, #tpu.memory_space<vmem>>, %arg4: memref<8x35xf32, #tpu.memory_space<vmem>>) attributes {dimension_semantics = [#tpu.dimension_semantics<parallel>], iteration_bounds = array<i64: 2>, scalar_prefetch = 0 : i64, scratch_operands = 0 : i64, tpu.core_type = #tpu.core_type<tc>, window_params = [{transform_indices = @transform_0, window_bounds = array<i64: 8, 35>}, {pipeline_mode = #tpu.pipeline_mode<synchronous>, transform_indices = @transform_1, window_bounds = array<i64: 35, 35>}, {pipeline_mode = #tpu.pipeline_mode<synchronous>, transform_indices = @transform_2, window_bounds = array<i64: 1, 35>}, {transform_indices = @transform_3, window_bounds = array<i64: 8, 35>}]} {
    %c0 = arith.constant 0 : index
    %c0_0 = arith.constant 0 : index
    %0 = vector.load %arg1[%c0, %c0_0] : memref<8x35xf32, #tpu.memory_space<vmem>>, vector<8x35xf32>
    %c0_1 = arith.constant 0 : index
    %c0_2 = arith.constant 0 : index
    %1 = vector.load %arg2[%c0_1, %c0_2] : memref<35x35xf32, #tpu.memory_space<vmem>>, vector<35x35xf32>
    %cst = arith.constant dense<0.000000e+00> : vector<8x35xf32>
    %2 = tpu.matmul %0, %1, %cst {dimension_numbers = #tpu.dot_dimension_numbers<[1], [0], [0], [1], [0, 0, 1, 1], [], []>} : vector<8x35xf32>, vector<35x35xf32>, vector<8x35xf32> -> vector<8x35xf32>
    %c0_3 = arith.constant 0 : index
    %c0_4 = arith.constant 0 : index
    %3 = vector.load %arg3[%c0_3, %c0_4] : memref<1x35xf32, #tpu.memory_space<vmem>>, vector<1x35xf32>
    %4 = vector.broadcast %3 : vector<1x35xf32> to vector<8x35xf32>
    %5 = arith.addf %2, %4 : vector<8x35xf32>
    %c0_5 = arith.constant 0 : index
    %c0_6 = arith.constant 0 : index
    %6 = vector.load %arg4[%c0_5, %c0_6] : memref<8x35xf32, #tpu.memory_space<vmem>>, vector<8x35xf32>
    tpu.vector_store %arg4[%c0_5, %c0_6], %5 {strides = array<i32>} : memref<8x35xf32, #tpu.memory_space<vmem>>, vector<8x35xf32>,
    return
  }
  func.func @transform_0(%arg0: i32) -> (i32, i32) {
    %c0_i32 = arith.constant 0 : i32
    %c0_i32_0 = arith.constant 0 : i32
    return %arg0, %c0_i32 : i32, i32
  }
  func.func @transform_1(%arg0: i32) -> (i32, i32) {
    %c0_i32 = arith.constant 0 : i32
    %c0_i32_0 = arith.constant 0 : i32
    %c0_i32_1 = arith.constant 0 : i32
    return %c0_i32, %c0_i32_0 : i32, i32
  }
  func.func @transform_2(%arg0: i32) -> (i32, i32) {
    %c0_i32 = arith.constant 0 : i32
    %c0_i32_0 = arith.constant 0 : i32
    %c0_i32_1 = arith.constant 0 : i32
    return %c0_i32, %c0_i32_0 : i32, i32
  }
  func.func @transform_3(%arg0: i32) -> (i32, i32) {
    %c0_i32 = arith.constant 0 : i32
    %c0_i32_0 = arith.constant 0 : i32
    return %arg0, %c0_i32 : i32, i32
  }
}

</mosaic_0001>

<llo_original>
// kernel: _pallas_linear_resident.1
$region0: #{_pallas_linear_resident.1}
  #allocation0 [shape = 'u32[]', space=smem, size = 0x4, offset = 0x4, fixed_abs, tag = 'smem constant byte address 0x4 - core index']
  #allocation1 [shape = 'u32[144,128]{1,0:T(1,128)}', space=vmem, size = 0x12000, scoped, tag = 'internal scratch']
  %s0 = inlined_call_operand.hbm [shape: f32[16,35], index: 0, kind: input, shape index: {}]
  %s1 = inlined_call_operand.hbm [shape: f32[35,35], index: 1, kind: input, shape index: {}]
  %s2 = inlined_call_operand.vmem [shape: f32[1,35], index: 2, kind: input, shape index: {}]
  %s3 = inlined_call_operand.hbm [shape: f32[16,35], index: 3, kind: output, shape index: {}]
  %s4 = sld [smem:[#allocation0]]
  $region53: #{_pallas_linear_resident.1} parent=0
    _
  %s6 = ssub.s32 1, %s4
  %s7 = scalar_select 0, %s6, %s4
  $region1: #{_pallas_linear_resident.1} parent=0
    #allocation2 [shape = 'u8[8192]{0}', space=vmem, size = 0x2000, scoped, tag = 'input window, operand 0']
    #allocation3 [shape = 's32[2]{0}', space=sflag, size = 0x8, scoped, tag = 'scoped memory for _pallas_linear_resident.1']
    #allocation4 [shape = 's32[2]{0}', space=sflag, size = 0x8, scoped, tag = 'scoped memory for _pallas_linear_resident.1']
    #allocation5 [shape = 'u8[20480]{0}', space=vmem, size = 0x5000, scoped, tag = 'input window, operand 1, single buffered']
    #allocation6 [shape = 's32[1]{0}', space=sflag, size = 0x4, scoped, tag = 'scoped memory for _pallas_linear_resident.1']
    #allocation7 [shape = 'u8[8192]{0}', space=vmem, size = 0x2000, scoped, tag = 'output window, operand 0']
    %8 = vsyncpa [#allocation3], 0
    %s9 = scalar_lea.sflag [#allocation3], 1
    %10 = vsyncpa %s9, 0
    %11 = vsyncpa [#allocation6], 0
    %12 = vsyncpa [#allocation4], 0
    %s13 = scalar_lea.sflag [#allocation4], 1
    %14 = vsyncpa %s13, 0
    loop: start=0, step=1, limit=4
    $region2: #{_pallas_linear_resident.1} parent=1 // loop_pre_header
      _
    $region3: #{_pallas_linear_resident.1} parent=1 // loop_header
      %s16 = sphi 0, %s20
      %p17 = scmp.ge.s32.totalorder %s16, 4
      %s26 = sphi 0, %s28
      %s29 = sphi 0, %s26
      %s30 = sphi 0, %s29
      %s46 = sphi 0, %s30
      %s50 = sphi 0, %s50
      %s52 = sphi 0, %s50
      %s53 = sphi 0, %s52
      %s67 = sphi 0, %s53
      %s71 = sphi 0, %s71
      %s73 = sphi 0, %s71
      %s74 = sphi 0, %s73
      %s88 = sphi 0, %s74
      %s94 = sphi 0, %s96
      %s97 = sphi 0, %s94
      %s98 = sphi 0, %s97
      %s114 = sphi 0, %s98
    $region4: #{_pallas_linear_resident.1} parent=1 // loop_header_branch
      %19 = sbr.rel (%p17) target = $region8
    $region5: #{_pallas_linear_resident.1} parent=1 // loop_body
      %s21 = ssub.s32 %s16, 1
      %s22 = ssub.s32 %s16, 2
      %s23 = sadd.s32 %s16, 1
      %s24 = ssub.s32 %s16, %s23
      %p25 = scmp.eq.s32.totalorder %s24, 0
      %s27 = sadd.s32 %s26, 1
      %s28 = scalar_select %p25, %s26, %s27
      %p31 = pneg %p25
      %p32 = scmp.eq.s32.totalorder %s16, 1
      %p33 = por %p31, %p32
      %p34 = scmp.ne.s32.totalorder %s26, %s29
      %p35 = scmp.eq.s32.totalorder %s16, 0
      %p36 = por %p34, %p35
      %p37 = scmp.ne.s32.totalorder %s26, %s29
      %p38 = scmp.eq.s32.totalorder %s21, 1
      %p39 = por %p37, %p38
      %p40 = scmp.ne.s32.totalorder %s29, %s30
      %p41 = scmp.eq.s32.totalorder %s21, 0
      %p42 = por %p40, %p41
      %p43 = scmp.ne.s32.totalorder %s29, %s30
      %p44 = scmp.eq.s32.totalorder %s22, 1
      %p45 = por %p43, %p44
      %p47 = scmp.ne.s32.totalorder %s30, %s46
      %p48 = scmp.eq.s32.totalorder %s22, 0
      %p49 = por %p47, %p48
      %s51 = sadd.s32 %s50, 1
      %p54 = scmp.eq.s32.totalorder %s16, 1
      %p55 = scmp.ne.s32.totalorder %s50, %s52
      %p56 = scmp.eq.s32.totalorder %s16, 0
      %p57 = por %p55, %p56
      %p58 = scmp.ne.s32.totalorder %s50, %s52
      %p59 = scmp.eq.s32.totalorder %s21, 1
      %p60 = por %p58, %p59
      %p61 = scmp.ne.s32.totalorder %s52, %s53
      %p62 = scmp.eq.s32.totalorder %s21, 0
      %p63 = por %p61, %p62
      %p64 = scmp.ne.s32.totalorder %s52, %s53
      %p65 = scmp.eq.s32.totalorder %s22, 1
      %p66 = por %p64, %p65
      %p68 = scmp.ne.s32.totalorder %s53, %s67
      %p69 = scmp.eq.s32.totalorder %s22, 0
      %p70 = por %p68, %p69
      %s72 = sadd.s32 %s71, 1
      %p75 = scmp.eq.s32.totalorder %s16, 1
      %p76 = scmp.ne.s32.totalorder %s71, %s73
      %p77 = scmp.eq.s32.totalorder %s16, 0
      %p78 = por %p76, %p77
      %p79 = scmp.ne.s32.totalorder %s71, %s73
      %p80 = scmp.eq.s32.totalorder %s21, 1
      %p81 = por %p79, %p80
      %p82 = scmp.ne.s32.totalorder %s73, %s74
      %p83 = scmp.eq.s32.totalorder %s21, 0
      %p84 = por %p82, %p83
      %p85 = scmp.ne.s32.totalorder %s73, %s74
      %p86 = scmp.eq.s32.totalorder %s22, 1
      %p87 = por %p85, %p86
      %p89 = scmp.ne.s32.totalorder %s74, %s88
      %p90 = scmp.eq.s32.totalorder %s22, 0
      %p91 = por %p89, %p90
      %s92 = ssub.s32 %s16, %s23
      %p93 = scmp.eq.s32.totalorder %s92, 0
      %s95 = sadd.s32 %s94, 1
      %s96 = scalar_select %p93, %s94, %s95
      %p99 = pneg %p93
      %p100 = scmp.eq.s32.totalorder %s16, 1
      %p101 = por %p99, %p100
      %p102 = scmp.ne.s32.totalorder %s94, %s97
      %p103 = scmp.eq.s32.totalorder %s16, 0
      %p104 = por %p102, %p103
      %p105 = scmp.ne.s32.totalorder %s94, %s97
      %p106 = scmp.eq.s32.totalorder %s21, 1
      %p107 = por %p105, %p106
      %p108 = scmp.ne.s32.totalorder %s97, %s98
      %p109 = scmp.eq.s32.totalorder %s21, 0
      %p110 = por %p108, %p109
      %p111 = scmp.ne.s32.totalorder %s97, %s98
      %p112 = scmp.eq.s32.totalorder %s22, 1
      %p113 = por %p111, %p112
      %p115 = scmp.ne.s32.totalorder %s98, %s114
      %p116 = scmp.eq.s32.totalorder %s22, 0
      %p117 = por %p115, %p116
      %p118 = scmp.le.s32.totalorder 1, %s16
      %p119 = scmp.lt.s32.totalorder %s16, 3
      %p120 = pnand %p118, %p119
      %p121 = pneg %p120
      // Predicated region
      $region9: #{_pallas_linear_resident.1} parent=5 // pred_check
        _
      $region10: #{_pallas_linear_resident.1} parent=5 // pred_check_branch
        %123 = sbr.rel (%p120) target = $region12
      $region11: #{_pallas_linear_resident.1} parent=5 // pred_region
        %s124 = ssub.s32 %s16, 1
        // Predicated region
        $region13: #{_pallas_linear_resident.1} parent=11 // pred_check
          %p125 = pneg %p63
        $region14: #{_pallas_linear_resident.1} parent=11 // pred_check_branch
          %127 = sbr.rel (%p125) target = $region16
        $region15: #{_pallas_linear_resident.1} parent=11 // pred_region
          %s129 = ssub.s32 640, 640
          %130 = vsyncadd [#allocation6], %s129
          %s131 = sshll.u32 [#allocation5], 4
          %s132 = int_to_ptr.vmem [resolvable:$true] %s131
          %137 = dma.hbm_to_vmem [thread:$0]  %s1, 640, %s132, [#allocation6], 128, 128, 8
        $region16: #{_pallas_linear_resident.1} parent=11 // pred_fallthru
          _
        // Predicated region
        $region17: #{_pallas_linear_resident.1} parent=11 // pred_check
          %p138 = pneg %p84
        $region18: #{_pallas_linear_resident.1} parent=11 // pred_check_branch
          %140 = sbr.rel (%p138) target = $region20
        $region19: #{_pallas_linear_resident.1} parent=11 // pred_region
          _
        $region20: #{_pallas_linear_resident.1} parent=11 // pred_fallthru
          _
      $region12: #{_pallas_linear_resident.1} parent=5 // pred_fallthru
        _
      %p141 = scmp.lt.s32.totalorder %s16, 2
      // Predicated region
      $region21: #{_pallas_linear_resident.1} parent=5 // pred_check
        %p142 = pneg %p141
      $region22: #{_pallas_linear_resident.1} parent=5 // pred_check_branch
        %144 = sbr.rel (%p142) target = $region24
      $region23: #{_pallas_linear_resident.1} parent=5 // pred_region
        // Predicated region
        $region25: #{_pallas_linear_resident.1} parent=23 // pred_check
          %p145 = pneg %p36
        $region26: #{_pallas_linear_resident.1} parent=23 // pred_check_branch
          %147 = sbr.rel (%p145) target = $region28
        $region27: #{_pallas_linear_resident.1} parent=23 // pred_region
          %s148 = sand.u32 %s26, 1
          %s149 = scalar_lea.sflag [#allocation3], %s148
          %s150 = sand.u32 %s26, 1
          %s151 = smul.addr %s150, 8
          %s152 = scalar_lea.vmem [#allocation2], %s151
          %s154 = ssub.s32 128, 128
          %155 = vsyncadd %s149, %s154
          %s156 = smul.addr %s16, 128
          %s157 = scalar_lea.hbm %s0, %s156
          %s159 = sshll.u32 %s152, 4
          %s160 = int_to_ptr.vmem [resolvable:$true] %s159
          %162 = dma.hbm_to_vmem [thread:$0]  %s157, 128, %s160, %s149
        $region28: #{_pallas_linear_resident.1} parent=23 // pred_fallthru
          _
      $region24: #{_pallas_linear_resident.1} parent=5 // pred_fallthru
        _
      %p163 = scmp.le.s32.totalorder 1, %s16
      %p164 = scmp.lt.s32.totalorder %s16, 3
      %p165 = pnand %p163, %p164
      %p166 = pneg %p165
      // Predicated region
      $region29: #{_pallas_linear_resident.1} parent=5 // pred_check
        _
      $region30: #{_pallas_linear_resident.1} parent=5 // pred_check_branch
        %168 = sbr.rel (%p165) target = $region32
      $region31: #{_pallas_linear_resident.1} parent=5 // pred_region
        %s169 = ssub.s32 %s16, 1
        %s170 = sand.u32 %s29, 1
        %s171 = scalar_lea.sflag [#allocation3], %s170
        %s172 = sand.u32 %s29, 1
        %s173 = smul.addr %s172, 8
        %s174 = scalar_lea.vmem [#allocation2], %s173
        // Predicated region
        $region33: #{_pallas_linear_resident.1} parent=31 // pred_check
          %p175 = pneg %p42
        $region34: #{_pallas_linear_resident.1} parent=31 // pred_check_branch
          %177 = sbr.rel (%p175) target = $region36
        $region35: #{_pallas_linear_resident.1} parent=31 // pred_region
          %178 = dma.done %s171, 128
        $region36: #{_pallas_linear_resident.1} parent=31 // pred_fallthru
          _
        // Predicated region
        $region37: #{_pallas_linear_resident.1} parent=31 // pred_check
          %p179 = pneg %p63
        $region38: #{_pallas_linear_resident.1} parent=31 // pred_check_branch
          %181 = sbr.rel (%p179) target = $region40
        $region39: #{_pallas_linear_resident.1} parent=31 // pred_region
          %182 = dma.done [#allocation6], 640
        $region40: #{_pallas_linear_resident.1} parent=31 // pred_fallthru
          _
        %s183 = sand.u32 %s29, 1
        %s184 = scalar_lea.sflag [#allocation3], %s183
        %s185 = sand.u32 %s29, 1
        %s186 = smul.addr %s185, 8
        %s187 = scalar_lea.vmem [#allocation2], %s186
        %p188 = pneg %p42
        %p189 = pneg %p39
        %p190 = pneg %p63
        %p191 = pneg %p60
        %p192 = pneg %p84
        %p193 = pneg %p81
        %p194 = pneg %p110
        %p195 = pneg %p107
        %s196 = sand.u32 %s97, 1
        %s197 = scalar_lea.sflag [#allocation4], %s196
        %s198 = sand.u32 %s97, 1
        %s199 = smul.addr %s198, 8
        %s200 = scalar_lea.vmem [#allocation7], %s199
        %v201 = vld [vmem:[%s174] sm:$0xff]
        %v202 = vld [vmem:[#allocation5] sm:$0xff]
        %v203 = vld [vmem:[#allocation5 + $0x8] sm:$0xff]
        %v204 = vld [vmem:[#allocation5 + $0x10] sm:$0xff]
        %v205 = vld [vmem:[#allocation5 + $0x18] sm:$0xff]
        %v206 = vld [vmem:[#allocation5 + $0x20] sm:$0x7]
        %v207 = vld [vmem:[%s2] sm:$0x1]
        %v209 = vlaneseq
        %v210 = vshrl.u32 %v209, 7
        %v211 = vsub.s32 0, %v210
        %v212 = vrot.slane %v207, %v211
        %vm214 = vcmask 285696
        %v216 = vsel %vm214, %v201, 0
        %vm218 = vcmask 1042432
        %v220 = vsel %vm218, %v206, 0
        %222 = vmatprep.subr.mxu0 0.0
        %223 = vmatpush1.msra.mxu0 %v202
        %224 = vmatprep.subr.mxu0 0.0
        %225 = vmatpush1.msra.mxu0 %v203
        %226 = vmatprep.subr.mxu0 0.0
        %227 = vmatpush1.msra.mxu0 %v204
        %228 = vmatprep.subr.mxu0 0.0
        %229 = vmatpush1.msra.mxu0 %v205
        %230 = vmatprep.subr.mxu0 0.0
        %231 = vmatpush1.msra.mxu0 %v220
        %232 = vmatprep.subr.mxu0 0.0
        %233 = vmatpush1.msra.mxu0 0.0
        %234 = vmatprep.subr.mxu0 0.0
        %235 = vmatpush1.msra.mxu0 0.0
        %236 = vmatprep.subr.mxu0 0.0
        %237 = vmatpush1.msra.mxu0 0.0
        %238 = vmatprep.subr.mxu0 0.0
        %239 = vmatpush1.msra.mxu0 0.0
        %240 = vmatprep.subr.mxu0 0.0
        %241 = vmatpush1.msra.mxu0 0.0
        %242 = vmatprep.subr.mxu0 0.0
        %243 = vmatpush1.msra.mxu0 0.0
        %244 = vmatprep.subr.mxu0 0.0
        %245 = vmatpush1.msra.mxu0 0.0
        %246 = vmatprep.subr.mxu0 0.0
        %247 = vmatpush1.msra.mxu0 0.0
        %248 = vmatprep.subr.mxu0 0.0
        %249 = vmatpush1.msra.mxu0 0.0
        %250 = vmatprep.subr.mxu0 0.0
        %251 = vmatpush1.msra.mxu0 0.0
        %252 = vmatprep.subr.mxu0 0.0
        %253 = vmatpush1.msra.mxu0 0.0
        %254 = vmatprep.subr.mxu0 0.0
        %255 = vmatpush1.msra.mxu0 0.0
        %256 = vmatprep.subr.mxu0 0.0
        %257 = vmatpush1.msra.mxu0 0.0
        %258 = vmatprep.subr.mxu0 0.0
        %259 = vmatpush1.msra.mxu0 0.0
        %260 = vmatprep.subr.mxu0 0.0
        %261 = vmatpush1.msra.mxu0 0.0
        %262 = vmatprep.subr.mxu0 0.0
        %263 = vmatpush1.msra.mxu0 0.0
        %264 = vmatprep.subr.mxu0 0.0
        %265 = vmatpush1.msra.mxu0 0.0
        %266 = vmatprep.subr.mxu0 0.0
        %267 = vmatpush1.msra.mxu0 0.0
        %268 = vmatprep.subr.mxu0 0.0
        %269 = vmatpush1.msra.mxu0 0.0
        %270 = vmatprep.subr.mxu0 0.0
        %271 = vmatpush1.msra.mxu0 0.0
        %272 = vmatprep.subr.mxu0 0.0
        %273 = vmatpush1.msra.mxu0 0.0
        %274 = vmatprep.subr.mxu0 0.0
        %275 = vmatpush1.msra.mxu0 0.0
        %276 = vmatprep.subr.mxu0 0.0
        %277 = vmatpush1.msra.mxu0 0.0
        %278 = vmatprep.subr.mxu0 0.0
        %279 = vmatpush1.msra.mxu0 0.0
        %280 = vmatprep.subr.mxu0 0.0
        %281 = vmatpush1.msra.mxu0 0.0
        %282 = vmatprep.subr.mxu0 0.0
        %283 = vmatpush1.msra.mxu0 0.0
        %284 = vmatprep.subr.mxu0 0.0
        %285 = vmatpush1.msra.mxu0 0.0
        %286 = vmatprep.mubr.f32.mxu0 0.0
        %287 = vmatmul.mubr.f32.gmra.mrb[0].mxu0 %v216
        %v288 = vpop.f32.mrb[0].mxu0
        %v289 = vadd.f32 %v212, %v288
        %v290 = vpop.f32.mrb[0].mxu0
        %291 = vdwg.mxu0
        %292 = vst.msk [vmem:[%s200] sm:$0xff] %vm214, %v289
        %s293 = sand.u32 %s97, 1
        %s294 = scalar_lea.sflag [#allocation4], %s293
        %s295 = sand.u32 %s97, 1
        %s296 = smul.addr %s295, 8
        %s297 = scalar_lea.vmem [#allocation7], %s296
        // Predicated region
        $region41: #{_pallas_linear_resident.1} parent=31 // pred_check
          %p298 = pneg %p107
        $region42: #{_pallas_linear_resident.1} parent=31 // pred_check_branch
          %300 = sbr.rel (%p298) target = $region44
        $region43: #{_pallas_linear_resident.1} parent=31 // pred_region
          %s302 = ssub.s32 128, 128
          %303 = vsyncadd %s294, %s302
          %s304 = smul.addr %s21, 128
          %s305 = scalar_lea.hbm %s3, %s304
          %s307 = sshll.u32 %s297, 4
          %s308 = int_to_ptr.vmem [resolvable:$true] %s307
          %310 = dma.vmem_to_hbm [thread:$0]  %s308, 128, %s305, %s294
        $region44: #{_pallas_linear_resident.1} parent=31 // pred_fallthru
          _
      $region32: #{_pallas_linear_resident.1} parent=5 // pred_fallthru
        _
      %p311 = scmp.le.s32.totalorder 2, %s16
      // Predicated region
      $region45: #{_pallas_linear_resident.1} parent=5 // pred_check
        %p312 = pneg %p311
      $region46: #{_pallas_linear_resident.1} parent=5 // pred_check_branch
        %314 = sbr.rel (%p312) target = $region48
      $region47: #{_pallas_linear_resident.1} parent=5 // pred_region
        %s315 = ssub.s32 %s16, 2
        // Predicated region
        $region49: #{_pallas_linear_resident.1} parent=47 // pred_check
          %p316 = pneg %p113
        $region50: #{_pallas_linear_resident.1} parent=47 // pred_check_branch
          %318 = sbr.rel (%p316) target = $region52
        $region51: #{_pallas_linear_resident.1} parent=47 // pred_region
          %s319 = sand.u32 %s98, 1
          %s320 = scalar_lea.sflag [#allocation4], %s319
          %s321 = sand.u32 %s98, 1
          %s322 = smul.addr %s321, 8
          %s323 = scalar_lea.vmem [#allocation7], %s322
          %324 = dma.done %s320, 128
        $region52: #{_pallas_linear_resident.1} parent=47 // pred_fallthru
          _
      $region48: #{_pallas_linear_resident.1} parent=5 // pred_fallthru
        _
    $region6: #{_pallas_linear_resident.1} parent=1 // loop_footer
      %s20 = sadd.s32 1, %s16
    $region7: #{_pallas_linear_resident.1} parent=1 // loop_footer_branch
      %15 = sbr.rel target = $region3
    $region8: #{_pallas_linear_resident.1} parent=1 // loop_exit
      _
    %325 = vsyncpa [#allocation3], 1
    %s326 = scalar_lea.sflag [#allocation3], 1
    %327 = vsyncpa %s326, 1
    %328 = vsyncpa [#allocation6], 1
    %329 = vsyncpa [#allocation4], 1
    %s330 = scalar_lea.sflag [#allocation4], 1
    %331 = vsyncpa %s330, 1

</llo_original>
